<compile_context>
chip_gen: v7x
topology: tpu7x:2x2x1
jax: 0.10.0
libtpu: 0.0.40
codegen_flags: <defaults>
</compile_context>

<pallas_src>
from functools import partial

import numpy as np
import jax
import jax.numpy as jnp
from jax.experimental import pallas as pl
from jax.experimental.pallas import tpu as pltpu

# Original 10 linear layers (in_features, out_features), forward order.
LAYER_DIMS = [
    (128, 64), (64, 32), (32, 16), (16, 8), (8, 8),   # MLP   (encoder)
    (8, 8), (8, 16), (16, 32), (32, 64), (64, 128),   # MLP_de (decoder)
]
# tanh after every layer except the last layer of each sub-MLP.
APPLY_TANH = [True, True, True, True, False,
              True, True, True, True, False]

# After fusing layers 4 & 5 (no tanh between them) we run 9 layers.
NUM_FUSED_LAYERS = 9
FUSED_APPLY_TANH = [True, True, True, True, True, True, True, True, False]

PAD = 128        # lane-dense width all activations / weights are padded to
MAX_TB = 2048    # max batch-tile rows per grid step (~4 MiB VMEM worst case)


def _bf16_epilogue_supported():
    """bf16 VPU/EUP exist on v6e / v7x; keep f32 elementwise on v5e & older."""
    try:
        kind = jax.devices()[0].device_kind.lower()
    except Exception:  # pragma: no cover - defensive
        return False
    return ("v6" in kind) or ("v7" in kind)


_USE_BF16_EPILOGUE = _bf16_epilogue_supported()


def mlp_chain_kernel(x_ref, w_ref, b_ref, o_ref, *, use_bf16):
    """One batch tile through the whole fused 9-layer chain (all in VMEM).

    x_ref : (TB, 128)        f32
    w_ref : (9, 128, 128)    bf16  zero-padded (in, out) weights
    b_ref : (9, 128)         f32   zero-padded biases
    o_ref : (TB, 128)        f32
    """
    h = x_ref[...]                                    # (TB, 128) f32
    if use_bf16:
        h = h.astype(jnp.bfloat16)
    for i in range(NUM_FUSED_LAYERS):                 # fully unrolled static loop
        w = w_ref[i]                                  # (128, 128) bf16, static index
        b = b_ref[pl.ds(i, 1), :]                     # (1, 128)   f32, static slice
        if use_bf16:
            # MXU: bf16 x bf16 -> f32 accumulate, f32 bias add, one downcast,
            # tanh on bf16 vregs (half the EUP/VPU vregs per layer).
            z = jnp.dot(h, w, preferred_element_type=jnp.float32) + b
            if FUSED_APPLY_TANH[i]:
                h = jnp.tanh(z.astype(jnp.bfloat16))
            else:
                h = z                                  # final layer stays f32
        else:
            z = jnp.dot(h.astype(jnp.bfloat16), w,
                        preferred_element_type=jnp.float32) + b
            h = jnp.tanh(z) if FUSED_APPLY_TANH[i] else z
    o_ref[...] = h.astype(o_ref.dtype)


def _choose_tile(batch):
    """Balanced batch tiles; >=2 tiles for moderate batches (v7x megacore)."""
    n_tiles = max(1, pl.cdiv(batch, MAX_TB))
    if batch >= 256:
        n_tiles = max(n_tiles, 2)
    tb = ((pl.cdiv(batch, n_tiles) + 7) // 8) * 8     # multiple of 8 sublanes
    return tb


@partial(jax.jit, static_argnames=("use_bf16",))
def mlp_module_8_128_forward(x, w_slab, b_slab, *, use_bf16=False):
    batch = x.shape[0]
    tb = _choose_tile(batch)
    grid = pl.cdiv(batch, tb)

    out = pl.pallas_call(
        partial(mlp_chain_kernel, use_bf16=use_bf16),
        out_shape=jax.ShapeDtypeStruct((batch, PAD), x.dtype),
        grid_spec=pltpu.PrefetchScalarGridSpec(
            num_scalar_prefetch=0,
            grid=(grid,),
            in_specs=[
                pl.BlockSpec((tb, PAD), lambda i: (i, 0)),
                # packed params: constant block index -> fetched once, stays resident
                pl.BlockSpec((NUM_FUSED_LAYERS, PAD, PAD), lambda i: (0, 0, 0)),
                pl.BlockSpec((NUM_FUSED_LAYERS, PAD), lambda i: (0, 0)),
            ],
            out_specs=pl.BlockSpec((tb, PAD), lambda i: (i, 0)),
        ),
        compiler_params=pltpu.CompilerParams(
            dimension_semantics=("parallel",)),   # shards batch tiles across TCs (v7x)
    )(x, w_slab, b_slab)
    return out


def init_params(key):
    """Deterministic PyTorch-Linear-style init: U(-1/sqrt(fan_in), 1/sqrt(fan_in))."""
    params = []
    for (fan_in, fan_out) in LAYER_DIMS:
        key, kw, kb = jax.random.split(key, 3)
        bound = 1.0 / jnp.sqrt(jnp.float32(fan_in))
        w = jax.random.uniform(kw, (fan_in, fan_out), jnp.float32, -bound, bound)
        b = jax.random.uniform(kb, (1, fan_out), jnp.float32, -bound, bound)
        params.append((w, b))
    return params


def pack_params(params):
    """Fuse layers 4 & 5 exactly (f64 on host), zero-pad to 128 lanes, stack."""
    w4 = np.asarray(params[4][0], np.float64)
    b4 = np.asarray(params[4][1], np.float64)
    w5 = np.asarray(params[5][0], np.float64)
    b5 = np.asarray(params[5][1], np.float64)
    w45 = (w4 @ w5).astype(np.float32)            # (8, 8)  exact tanh-free fusion
    b45 = (b4 @ w5 + b5).astype(np.float32)       # (1, 8)

    fused = [(np.asarray(w, np.float32), np.asarray(b, np.float32))
             for (w, b) in params[:4]]
    fused += [(w45, b45)]
    fused += [(np.asarray(w, np.float32), np.asarray(b, np.float32))
              for (w, b) in params[6:]]

    w_slab = np.zeros((NUM_FUSED_LAYERS, PAD, PAD), np.float32)
    b_slab = np.zeros((NUM_FUSED_LAYERS, PAD), np.float32)
    for i, (w, b) in enumerate(fused):
        w_slab[i, : w.shape[0], : w.shape[1]] = w
        b_slab[i, : b.shape[1]] = b[0]
    return jnp.asarray(w_slab, jnp.bfloat16), jnp.asarray(b_slab, jnp.float32)


def reference_forward_f32(x, params):
    """Exact f32 reference of the original 10-layer module."""
    h = x
    for i, (w, b) in enumerate(params):
        h = jnp.dot(h, w, precision=jax.lax.Precision.HIGHEST) + b
        if APPLY_TANH[i]:
            h = jnp.tanh(h)
    return h


def reference_forward_matched(x, w_slab, b_slab, *, use_bf16):
    """Plain-JAX version of the same math the kernel performs."""
    h = x.astype(jnp.bfloat16) if use_bf16 else x
    for i in range(NUM_FUSED_LAYERS):
        if use_bf16:
            z = jnp.dot(h, w_slab[i], preferred_element_type=jnp.float32) + b_slab[i]
            if FUSED_APPLY_TANH[i]:
                h = jnp.tanh(z.astype(jnp.bfloat16))
            else:
                h = z
        else:
            z = jnp.dot(h.astype(jnp.bfloat16), w_slab[i],
                        preferred_element_type=jnp.float32) + b_slab[i]
            h = jnp.tanh(z) if FUSED_APPLY_TANH[i] else z
    return h.astype(jnp.float32)


if __name__ == "__main__":
    key = jax.random.PRNGKey(0)
    key, kx = jax.random.split(key)

    params = init_params(key)
    w_slab, b_slab = pack_params(params)

    # batch=8 : exact tile; batch=20 : exercises the trailing partial block path
    for batch in (8, 20):
        x = jax.random.normal(jax.random.fold_in(kx, batch), (batch, 128), jnp.float32)

        out = jax.block_until_ready(
            mlp_module_8_128_forward(x, w_slab, b_slab,
                                     use_bf16=_USE_BF16_EPILOGUE))
        assert out.shape == (batch, 128), out.shape

        # 1) logic check: matches a plain-JAX implementation of the same math
        ref_matched = reference_forward_matched(x, w_slab, b_slab,
                                                use_bf16=_USE_BF16_EPILOGUE)
        assert jnp.allclose(out, ref_matched, atol=5e-3, rtol=5e-3), \
            f"kernel mismatch vs matched-precision reference (batch={batch})"

        # 2) semantic check: close to the exact f32 module (bounded bf16 drift)
        ref_f32 = reference_forward_f32(x, params)
        assert jnp.allclose(out, ref_f32, atol=3e-2, rtol=3e-2), \
            f"kernel drifts too far from f32 module reference (batch={batch})"

    print("KERNEL_OK")
</pallas_src>

<mosaic_0001>
module attributes {stable_mosaic.version = 11 : i64} {
  func.func @mlp_chain_kernel(%arg0: i32, %arg1: memref<8x128xf32, #tpu.memory_space<vmem>>, %arg2: memref<9x128x128xbf16, #tpu.memory_space<vmem>>, %arg3: memref<9x128xf32, #tpu.memory_space<vmem>>, %arg4: memref<8x128xf32, #tpu.memory_space<vmem>>) attributes {dimension_semantics = [#tpu.dimension_semantics<parallel>], iteration_bounds = array<i64: 1>, scalar_prefetch = 0 : i64, scratch_operands = 0 : i64, tpu.core_type = #tpu.core_type<tc>, window_params = [{transform_indices = @transform_0, window_bounds = array<i64: 8, 128>}, {pipeline_mode = #tpu.pipeline_mode<synchronous>, transform_indices = @transform_1, window_bounds = array<i64: 9, 128, 128>}, {pipeline_mode = #tpu.pipeline_mode<synchronous>, transform_indices = @transform_2, window_bounds = array<i64: 9, 128>}, {transform_indices = @transform_3, window_bounds = array<i64: 8, 128>}]} {
    %c0 = arith.constant 0 : index
    %c0_0 = arith.constant 0 : index
    %0 = vector.load %arg1[%c0, %c0_0] : memref<8x128xf32, #tpu.memory_space<vmem>>, vector<8x128xf32>
    %c0_1 = arith.constant 0 : index
    %c0_2 = arith.constant 0 : index
    %c0_3 = arith.constant 0 : index
    %1 = vector.load %arg2[%c0_1, %c0_2, %c0_3] : memref<9x128x128xbf16, #tpu.memory_space<vmem>>, vector<1x128x128xbf16>
    %2 = vector.shape_cast %1 : vector<1x128x128xbf16> to vector<128x128xbf16>
    %c0_4 = arith.constant 0 : index
    %c0_5 = arith.constant 0 : index
    %3 = vector.load %arg3[%c0_4, %c0_5] : memref<9x128xf32, #tpu.memory_space<vmem>>, vector<1x128xf32>
    %4 = arith.truncf %0 : vector<8x128xf32> to vector<8x128xbf16>
    %cst = arith.constant dense<0.000000e+00> : vector<8x128xf32>
    %5 = tpu.matmul %4, %2, %cst {dimension_numbers = #tpu.dot_dimension_numbers<[1], [0], [0], [1], [0, 0, 1, 1], [], []>} : vector<8x128xbf16>, vector<128x128xbf16>, vector<8x128xf32> -> vector<8x128xf32>
    %6 = vector.broadcast %3 : vector<1x128xf32> to vector<8x128xf32>
    %7 = arith.addf %5, %6 : vector<8x128xf32>
    %8 = math.tanh %7 : vector<8x128xf32>
    %c1 = arith.constant 1 : index
    %c0_6 = arith.constant 0 : index
    %c0_7 = arith.constant 0 : index
    %9 = vector.load %arg2[%c1, %c0_6, %c0_7] : memref<9x128x128xbf16, #tpu.memory_space<vmem>>, vector<1x128x128xbf16>
    %10 = vector.shape_cast %9 : vector<1x128x128xbf16> to vector<128x128xbf16>
    %c1_8 = arith.constant 1 : index
    %c0_9 = arith.constant 0 : index
    %11 = vector.load %arg3[%c1_8, %c0_9] : memref<9x128xf32, #tpu.memory_space<vmem>>, vector<1x128xf32>
    %12 = arith.truncf %8 : vector<8x128xf32> to vector<8x128xbf16>
    %cst_10 = arith.constant dense<0.000000e+00> : vector<8x128xf32>
    %13 = tpu.matmul %12, %10, %cst_10 {dimension_numbers = #tpu.dot_dimension_numbers<[1], [0], [0], [1], [0, 0, 1, 1], [], []>} : vector<8x128xbf16>, vector<128x128xbf16>, vector<8x128xf32> -> vector<8x128xf32>
    %14 = vector.broadcast %11 : vector<1x128xf32> to vector<8x128xf32>
    %15 = arith.addf %13, %14 : vector<8x128xf32>
    %16 = math.tanh %15 : vector<8x128xf32>
    %c2 = arith.constant 2 : index
    %c0_11 = arith.constant 0 : index
    %c0_12 = arith.constant 0 : index
    %17 = vector.load %arg2[%c2, %c0_11, %c0_12] : memref<9x128x128xbf16, #tpu.memory_space<vmem>>, vector<1x128x128xbf16>
    %18 = vector.shape_cast %17 : vector<1x128x128xbf16> to vector<128x128xbf16>
    %c2_13 = arith.constant 2 : index
    %c0_14 = arith.constant 0 : index
    %19 = vector.load %arg3[%c2_13, %c0_14] : memref<9x128xf32, #tpu.memory_space<vmem>>, vector<1x128xf32>
    %20 = arith.truncf %16 : vector<8x128xf32> to vector<8x128xbf16>
    %cst_15 = arith.constant dense<0.000000e+00> : vector<8x128xf32>
    %21 = tpu.matmul %20, %18, %cst_15 {dimension_numbers = #tpu.dot_dimension_numbers<[1], [0], [0], [1], [0, 0, 1, 1], [], []>} : vector<8x128xbf16>, vector<128x128xbf16>, vector<8x128xf32> -> vector<8x128xf32>
    %22 = vector.broadcast %19 : vector<1x128xf32> to vector<8x128xf32>
    %23 = arith.addf %21, %22 : vector<8x128xf32>
    %24 = math.tanh %23 : vector<8x128xf32>
    %c3 = arith.constant 3 : index
    %c0_16 = arith.constant 0 : index
    %c0_17 = arith.constant 0 : index
    %25 = vector.load %arg2[%c3, %c0_16, %c0_17] : memref<9x128x128xbf16, #tpu.memory_space<vmem>>, vector<1x128x128xbf16>
    %26 = vector.shape_cast %25 : vector<1x128x128xbf16> to vector<128x128xbf16>
    %c3_18 = arith.constant 3 : index
    %c0_19 = arith.constant 0 : index
    %27 = vector.load %arg3[%c3_18, %c0_19] : memref<9x128xf32, #tpu.memory_space<vmem>>, vector<1x128xf32>
    %28 = arith.truncf %24 : vector<8x128xf32> to vector<8x128xbf16>
    %cst_20 = arith.constant dense<0.000000e+00> : vector<8x128xf32>
    %29 = tpu.matmul %28, %26, %cst_20 {dimension_numbers = #tpu.dot_dimension_numbers<[1], [0], [0], [1], [0, 0, 1, 1], [], []>} : vector<8x128xbf16>, vector<128x128xbf16>, vector<8x128xf32> -> vector<8x128xf32>
    %30 = vector.broadcast %27 : vector<1x128xf32> to vector<8x128xf32>
    %31 = arith.addf %29, %30 : vector<8x128xf32>
    %32 = math.tanh %31 : vector<8x128xf32>
    %c4 = arith.constant 4 : index
    %c0_21 = arith.constant 0 : index
    %c0_22 = arith.constant 0 : index
    %33 = vector.load %arg2[%c4, %c0_21, %c0_22] : memref<9x128x128xbf16, #tpu.memory_space<vmem>>, vector<1x128x128xbf16>
    %34 = vector.shape_cast %33 : vector<1x128x128xbf16> to vector<128x128xbf16>
    %c4_23 = arith.constant 4 : index
    %c0_24 = arith.constant 0 : index
    %35 = vector.load %arg3[%c4_23, %c0_24] : memref<9x128xf32, #tpu.memory_space<vmem>>, vector<1x128xf32>
    %36 = arith.truncf %32 : vector<8x128xf32> to vector<8x128xbf16>
    %cst_25 = arith.constant dense<0.000000e+00> : vector<8x128xf32>
    %37 = tpu.matmul %36, %34, %cst_25 {dimension_numbers = #tpu.dot_dimension_numbers<[1], [0], [0], [1], [0, 0, 1, 1], [], []>} : vector<8x128xbf16>, vector<128x128xbf16>, vector<8x128xf32> -> vector<8x128xf32>
    %38 = vector.broadcast %35 : vector<1x128xf32> to vector<8x128xf32>
    %39 = arith.addf %37, %38 : vector<8x128xf32>
    %40 = math.tanh %39 : vector<8x128xf32>
    %c5 = arith.constant 5 : index
    %c0_26 = arith.constant 0 : index
    %c0_27 = arith.constant 0 : index
    %41 = vector.load %arg2[%c5, %c0_26, %c0_27] : memref<9x128x128xbf16, #tpu.memory_space<vmem>>, vector<1x128x128xbf16>
    %42 = vector.shape_cast %41 : vector<1x128x128xbf16> to vector<128x128xbf16>
    %c5_28 = arith.constant 5 : index
    %c0_29 = arith.constant 0 : index
    %43 = vector.load %arg3[%c5_28, %c0_29] : memref<9x128xf32, #tpu.memory_space<vmem>>, vector<1x128xf32>
    %44 = arith.truncf %40 : vector<8x128xf32> to vector<8x128xbf16>
    %cst_30 = arith.constant dense<0.000000e+00> : vector<8x128xf32>
    %45 = tpu.matmul %44, %42, %cst_30 {dimension_numbers = #tpu.dot_dimension_numbers<[1], [0], [0], [1], [0, 0, 1, 1], [], []>} : vector<8x128xbf16>, vector<128x128xbf16>, vector<8x128xf32> -> vector<8x128xf32>
    %46 = vector.broadcast %43 : vector<1x128xf32> to vector<8x128xf32>
    %47 = arith.addf %45, %46 : vector<8x128xf32>
    %48 = math.tanh %47 : vector<8x128xf32>
    %c6 = arith.constant 6 : index
    %c0_31 = arith.constant 0 : index
    %c0_32 = arith.constant 0 : index
    %49 = vector.load %arg2[%c6, %c0_31, %c0_32] : memref<9x128x128xbf16, #tpu.memory_space<vmem>>, vector<1x128x128xbf16>
    %50 = vector.shape_cast %49 : vector<1x128x128xbf16> to vector<128x128xbf16>
    %c6_33 = arith.constant 6 : index
    %c0_34 = arith.constant 0 : index
    %51 = vector.load %arg3[%c6_33, %c0_34] : memref<9x128xf32, #tpu.memory_space<vmem>>, vector<1x128xf32>
    %52 = arith.truncf %48 : vector<8x128xf32> to vector<8x128xbf16>
    %cst_35 = arith.constant dense<0.000000e+00> : vector<8x128xf32>
    %53 = tpu.matmul %52, %50, %cst_35 {dimension_numbers = #tpu.dot_dimension_numbers<[1], [0], [0], [1], [0, 0, 1, 1], [], []>} : vector<8x128xbf16>, vector<128x128xbf16>, vector<8x128xf32> -> vector<8x128xf32>
    %54 = vector.broadcast %51 : vector<1x128xf32> to vector<8x128xf32>
    %55 = arith.addf %53, %54 : vector<8x128xf32>
    %56 = math.tanh %55 : vector<8x128xf32>
    %c7 = arith.constant 7 : index
    %c0_36 = arith.constant 0 : index
    %c0_37 = arith.constant 0 : index
    %57 = vector.load %arg2[%c7, %c0_36, %c0_37] : memref<9x128x128xbf16, #tpu.memory_space<vmem>>, vector<1x128x128xbf16>
    %58 = vector.shape_cast %57 : vector<1x128x128xbf16> to vector<128x128xbf16>
    %c7_38 = arith.constant 7 : index
    %c0_39 = arith.constant 0 : index
    %59 = vector.load %arg3[%c7_38, %c0_39] : memref<9x128xf32, #tpu.memory_space<vmem>>, vector<1x128xf32>
    %60 = arith.truncf %56 : vector<8x128xf32> to vector<8x128xbf16>
    %cst_40 = arith.constant dense<0.000000e+00> : vector<8x128xf32>
    %61 = tpu.matmul %60, %58, %cst_40 {dimension_numbers = #tpu.dot_dimension_numbers<[1], [0], [0], [1], [0, 0, 1, 1], [], []>} : vector<8x128xbf16>, vector<128x128xbf16>, vector<8x128xf32> -> vector<8x128xf32>
    %62 = vector.broadcast %59 : vector<1x128xf32> to vector<8x128xf32>
    %63 = arith.addf %61, %62 : vector<8x128xf32>
    %64 = math.tanh %63 : vector<8x128xf32>
    %c8 = arith.constant 8 : index
    %c0_41 = arith.constant 0 : index
    %c0_42 = arith.constant 0 : index
    %65 = vector.load %arg2[%c8, %c0_41, %c0_42] : memref<9x128x128xbf16, #tpu.memory_space<vmem>>, vector<1x128x128xbf16>
    %66 = vector.shape_cast %65 : vector<1x128x128xbf16> to vector<128x128xbf16>
    %c8_43 = arith.constant 8 : index
    %c0_44 = arith.constant 0 : index
    %67 = vector.load %arg3[%c8_43, %c0_44] : memref<9x128xf32, #tpu.memory_space<vmem>>, vector<1x128xf32>
    %68 = arith.truncf %64 : vector<8x128xf32> to vector<8x128xbf16>
    %cst_45 = arith.constant dense<0.000000e+00> : vector<8x128xf32>
    %69 = tpu.matmul %68, %66, %cst_45 {dimension_numbers = #tpu.dot_dimension_numbers<[1], [0], [0], [1], [0, 0, 1, 1], [], []>} : vector<8x128xbf16>, vector<128x128xbf16>, vector<8x128xf32> -> vector<8x128xf32>
    %70 = vector.broadcast %67 : vector<1x128xf32> to vector<8x128xf32>
    %71 = arith.addf %69, %70 : vector<8x128xf32>
    %c0_46 = arith.constant 0 : index
    %c0_47 = arith.constant 0 : index
    %72 = vector.load %arg4[%c0_46, %c0_47] : memref<8x128xf32, #tpu.memory_space<vmem>>, vector<8x128xf32>
    tpu.vector_store %arg4[%c0_46, %c0_47], %71 {strides = array<i32>} : memref<8x128xf32, #tpu.memory_space<vmem>>, vector<8x128xf32>,
    return
  }
  func.func @transform_0(%arg0: i32) -> (i32, i32) {
    %c0_i32 = arith.constant 0 : i32
    %c0_i32_0 = arith.constant 0 : i32
    return %arg0, %c0_i32 : i32, i32
  }
  func.func @transform_1(%arg0: i32) -> (i32, i32, i32) {
    %c0_i32 = arith.constant 0 : i32
    %c0_i32_0 = arith.constant 0 : i32
    %c0_i32_1 = arith.constant 0 : i32
    %c0_i32_2 = arith.constant 0 : i32
    return %c0_i32, %c0_i32_0, %c0_i32_1 : i32, i32, i32
  }
  func.func @transform_2(%arg0: i32) -> (i32, i32) {
    %c0_i32 = arith.constant 0 : i32
    %c0_i32_0 = arith.constant 0 : i32
    %c0_i32_1 = arith.constant 0 : i32
    return %c0_i32, %c0_i32_0 : i32, i32
  }
  func.func @transform_3(%arg0: i32) -> (i32, i32) {
    %c0_i32 = arith.constant 0 : i32
    %c0_i32_0 = arith.constant 0 : i32
    return %arg0, %c0_i32 : i32, i32
  }
}

</mosaic_0001>

<llo_original>
// kernel: mlp_module_8_128_forward.1
$region0: #{mlp_module_8_128_forward.1}
  #allocation0 [shape = 'u32[]', space=smem, size = 0x4, offset = 0x4, fixed_abs, tag = 'smem constant byte address 0x4 - core index']
  #allocation1 [shape = 'u32[144,128]{1,0:T(1,128)}', space=vmem, size = 0x12000, scoped, tag = 'internal scratch']
  %s0 = inlined_call_operand.hbm [shape: f32[8,128], index: 0, kind: input, shape index: {}]
  %s1 = inlined_call_operand.hbm [shape: bf16[9,128,128], index: 1, kind: input, shape index: {}]
  %s2 = inlined_call_operand.hbm [shape: f32[9,128], index: 2, kind: input, shape index: {}]
  %s3 = inlined_call_operand.hbm [shape: f32[8,128], index: 3, kind: output, shape index: {}]
  %s4 = sld [smem:[#allocation0]]
  $region34: #{mlp_module_8_128_forward.1} parent=0
    _
  %s6 = ssub.s32 1, %s4
  %s7 = scalar_select 0, %s6, %s4
  $region1: #{mlp_module_8_128_forward.1} parent=0
    #allocation2 [shape = 'u8[4096]{0}', space=vmem, size = 0x1000, scoped, tag = 'input window, operand 0, single buffered']
    #allocation3 [shape = 's32[1]{0}', space=sflag, size = 0x4, scoped, tag = 'scoped memory for mlp_module_8_128_forward.1']
    #allocation4 [shape = 's32[1]{0}', space=sflag, size = 0x4, scoped, tag = 'scoped memory for mlp_module_8_128_forward.1']
    #allocation5 [shape = 'u8[294912]{0}', space=vmem, size = 0x48000, scoped, tag = 'input window, operand 1, single buffered']
    #allocation6 [shape = 's32[1]{0}', space=sflag, size = 0x4, scoped, tag = 'scoped memory for mlp_module_8_128_forward.1']
    #allocation7 [shape = 'u8[8192]{0}', space=vmem, size = 0x2000, scoped, tag = 'input window, operand 2, single buffered']
    #allocation8 [shape = 'u8[4096]{0}', space=vmem, size = 0x1000, scoped, tag = 'output window, operand 0, single buffered']
    %8 = vsyncpa [#allocation3], 0
    %9 = vsyncpa [#allocation6], 0
    %10 = vsyncpa [#allocation4], 0
    // Predicated region
    $region2: #{mlp_module_8_128_forward.1} parent=1 // pred_check
      _
    $region3: #{mlp_module_8_128_forward.1} parent=1 // pred_check_branch
      %12 = sbr.rel (0) target = $region5
    $region4: #{mlp_module_8_128_forward.1} parent=1 // pred_region
      %s14 = ssub.s32 128, 128
      %15 = vsyncadd [#allocation3], %s14
      %s17 = sshll.u32 [#allocation2], 4
      %s18 = int_to_ptr.vmem [resolvable:$true] %s17
      %20 = dma.hbm_to_vmem [thread:$0]  %s0, 128, %s18, [#allocation3]
    $region5: #{mlp_module_8_128_forward.1} parent=1 // pred_fallthru
      _
    // Predicated region
    $region6: #{mlp_module_8_128_forward.1} parent=1 // pred_check
      _
    $region7: #{mlp_module_8_128_forward.1} parent=1 // pred_check_branch
      %22 = sbr.rel (0) target = $region9
    $region8: #{mlp_module_8_128_forward.1} parent=1 // pred_region
      %s24 = ssub.s32 9216, 9216
      %25 = vsyncadd [#allocation6], %s24
      %s26 = sshll.u32 [#allocation5], 4
      %s27 = int_to_ptr.vmem [resolvable:$true] %s26
      %32 = dma.hbm_to_vmem [thread:$0]  %s1, 9216, %s27, [#allocation6], 64, 64, 4
    $region9: #{mlp_module_8_128_forward.1} parent=1 // pred_fallthru
      _
    // Predicated region
    $region10: #{mlp_module_8_128_forward.1} parent=1 // pred_check
      _
    $region11: #{mlp_module_8_128_forward.1} parent=1 // pred_check_branch
      %34 = sbr.rel (0) target = $region13
    $region12: #{mlp_module_8_128_forward.1} parent=1 // pred_region
      %s36 = ssub.s32 256, 256
      %37 = vsyncadd [#allocation6], %s36
      %s38 = sshll.u32 [#allocation7], 4
      %s39 = int_to_ptr.vmem [resolvable:$true] %s38
      %44 = dma.hbm_to_vmem [thread:$0]  %s2, 256, %s39, [#allocation6], 128, 128, 8
    $region13: #{mlp_module_8_128_forward.1} parent=1 // pred_fallthru
      _
    // Predicated region
    $region14: #{mlp_module_8_128_forward.1} parent=1 // pred_check
      _
    $region15: #{mlp_module_8_128_forward.1} parent=1 // pred_check_branch
      %46 = sbr.rel (0) target = $region17
    $region16: #{mlp_module_8_128_forward.1} parent=1 // pred_region
      %47 = dma.done [#allocation3], 128
    $region17: #{mlp_module_8_128_forward.1} parent=1 // pred_fallthru
      _
    // Predicated region
    $region18: #{mlp_module_8_128_forward.1} parent=1 // pred_check
      _
    $region19: #{mlp_module_8_128_forward.1} parent=1 // pred_check_branch
      %49 = sbr.rel (0) target = $region21
    $region20: #{mlp_module_8_128_forward.1} parent=1 // pred_region
      %50 = dma.done [#allocation6], 9216
    $region21: #{mlp_module_8_128_forward.1} parent=1 // pred_fallthru
      _
    // Predicated region
    $region22: #{mlp_module_8_128_forward.1} parent=1 // pred_check
      _
    $region23: #{mlp_module_8_128_forward.1} parent=1 // pred_check_branch
      %52 = sbr.rel (0) target = $region25
    $region24: #{mlp_module_8_128_forward.1} parent=1 // pred_region
      %53 = dma.done [#allocation6], 256
    $region25: #{mlp_module_8_128_forward.1} parent=1 // pred_fallthru
      _
    %v55 = vld [vmem:[#allocation2] sm:$0xff]
    %v56 = vld [vmem:[#allocation5] sm:$0xf]
    %v57 = vld [vmem:[#allocation5 + $0x4] sm:$0xf]
    %v58 = vld [vmem:[#allocation5 + $0x8] sm:$0xf]
    %v59 = vld [vmem:[#allocation5 + $0xc] sm:$0xf]
    %v60 = vld [vmem:[#allocation5 + $0x10] sm:$0xf]
    %v61 = vld [vmem:[#allocation5 + $0x14] sm:$0xf]
    %v62 = vld [vmem:[#allocation5 + $0x18] sm:$0xf]
    %v63 = vld [vmem:[#allocation5 + $0x1c] sm:$0xf]
    %v64 = vld [vmem:[#allocation5 + $0x20] sm:$0xf]
    %v65 = vld [vmem:[#allocation5 + $0x24] sm:$0xf]
    %v66 = vld [vmem:[#allocation5 + $0x28] sm:$0xf]
    %v67 = vld [vmem:[#allocation5 + $0x2c] sm:$0xf]
    %v68 = vld [vmem:[#allocation5 + $0x30] sm:$0xf]
    %v69 = vld [vmem:[#allocation5 + $0x34] sm:$0xf]
    %v70 = vld [vmem:[#allocation5 + $0x38] sm:$0xf]
    %v71 = vld [vmem:[#allocation5 + $0x3c] sm:$0xf]
    %v72 = vld [vmem:[#allocation7] sm:$0x1]
    %v73 = vpack.c.bf16 %v55, %v55
    %v74 = vlaneseq
    %v75 = vshrl.u32 %v74, 7
    %v76 = vsub.s32 0, %v75
    %v77 = vrot.slane %v72, %v76
    %v94 = vunpack.c.l.b16 %v56
    %v95 = vunpack.c.l.b16 %v57
    %v96 = vunpack.c.l.b16 %v58
    %v97 = vunpack.c.l.b16 %v59
    %v98 = vunpack.c.l.b16 %v60
    %v99 = vunpack.c.l.b16 %v61
    %v100 = vunpack.c.l.b16 %v62
    %v101 = vunpack.c.l.b16 %v63
    %v102 = vunpack.c.l.b16 %v64
    %v103 = vunpack.c.l.b16 %v65
    %v104 = vunpack.c.l.b16 %v66
    %v105 = vunpack.c.l.b16 %v67
    %v106 = vunpack.c.l.b16 %v68
    %v107 = vunpack.c.l.b16 %v69
    %v108 = vunpack.c.l.b16 %v70
    %v109 = vunpack.c.l.b16 %v71
    %v110 = vpack.c.b16 %v95, %v94
    %v111 = vpack.c.b16 %v97, %v96
    %v112 = vpack.c.b16 %v99, %v98
    %v113 = vpack.c.b16 %v101, %v100
    %v114 = vpack.c.b16 %v103, %v102
    %v115 = vpack.c.b16 %v105, %v104
    %v116 = vpack.c.b16 %v107, %v106
    %v117 = vpack.c.b16 %v109, %v108
    %126 = vmatprep.subr.bf16.mxu0 0
    %127 = vmatpush1.bf16.msra.mxu0 %v110
    %128 = vmatprep.subr.bf16.mxu0 0
    %129 = vmatpush1.bf16.msra.mxu0 %v111
    %130 = vmatprep.subr.bf16.mxu0 0
    %131 = vmatpush1.bf16.msra.mxu0 %v112
    %132 = vmatprep.subr.bf16.mxu0 0
    %133 = vmatpush1.bf16.msra.mxu0 %v113
    %134 = vmatprep.subr.bf16.mxu0 0
    %135 = vmatpush1.bf16.msra.mxu0 %v114
    %136 = vmatprep.subr.bf16.mxu0 0
    %137 = vmatpush1.bf16.msra.mxu0 %v115
    %138 = vmatprep.subr.bf16.mxu0 0
    %139 = vmatpush1.bf16.msra.mxu0 %v116
    %140 = vmatprep.subr.bf16.mxu0 0
    %141 = vmatpush1.bf16.msra.mxu0 %v117
    %142 = vmatprep.subr.bf16.mxu0 0
    %143 = vmatpush1.bf16.msra.mxu0 0
    %144 = vmatprep.subr.bf16.mxu0 0
    %145 = vmatpush1.bf16.msra.mxu0 0
    %146 = vmatprep.subr.bf16.mxu0 0
    %147 = vmatpush1.bf16.msra.mxu0 0
    %148 = vmatprep.subr.bf16.mxu0 0
    %149 = vmatpush1.bf16.msra.mxu0 0
    %150 = vmatprep.subr.bf16.mxu0 0
    %151 = vmatpush1.bf16.msra.mxu0 0
    %152 = vmatprep.subr.bf16.mxu0 0
    %153 = vmatpush1.bf16.msra.mxu0 0
    %154 = vmatprep.subr.bf16.mxu0 0
    %155 = vmatpush1.bf16.msra.mxu0 0
    %156 = vmatprep.subr.bf16.mxu0 0
    %157 = vmatpush1.bf16.msra.mxu0 0
    %158 = vmatprep.mubr.bf16.mxu0 0
    %159 = vmatmul.mubr.bf16.gmra.mrb[0].mxu0 %v73
    %v160 = vpop.f32.mrb[0].mxu0
    %v161 = vadd.f32 %v77, %v160
    %v162 = vpop.f32.mrb[0].mxu0
    %v163 = vpop.f32.mrb[0].mxu0
    %v164 = vpop.f32.mrb[0].mxu0
    %165 = vdwg.mxu0
    %v166 = vtanh.pop %v161
    %s167 = scalar_lea.vmem [#allocation5], 64
    %v168 = vld [vmem:[%s167] sm:$0xf]
    %v169 = vld [vmem:[%s167 + $0x4] sm:$0xf]
    %v170 = vld [vmem:[%s167 + $0x8] sm:$0xf]
    %v171 = vld [vmem:[%s167 + $0xc] sm:$0xf]
    %v172 = vld [vmem:[%s167 + $0x10] sm:$0xf]
    %v173 = vld [vmem:[%s167 + $0x14] sm:$0xf]
    %v174 = vld [vmem:[%s167 + $0x18] sm:$0xf]
    %v175 = vld [vmem:[%s167 + $0x1c] sm:$0xf]
    %v176 = vld [vmem:[%s167 + $0x20] sm:$0xf]
    %v177 = vld [vmem:[%s167 + $0x24] sm:$0xf]
    %v178 = vld [vmem:[%s167 + $0x28] sm:$0xf]
    %v179 = vld [vmem:[%s167 + $0x2c] sm:$0xf]
    %v180 = vld [vmem:[%s167 + $0x30] sm:$0xf]
    %v181 = vld [vmem:[%s167 + $0x34] sm:$0xf]
    %v182 = vld [vmem:[%s167 + $0x38] sm:$0xf]
    %v183 = vld [vmem:[%s167 + $0x3c] sm:$0xf]
    %v184 = vld [vmem:[#allocation7 + $0x1] sm:$0x1]
    %v185 = vpack.c.bf16 %v166, %v166
    %v186 = vlaneseq
    %v187 = vshrl.u32 %v186, 7
    %v188 = vsub.s32 0, %v187
    %v189 = vrot.slane %v184, %v188
    %v206 = vunpack.c.l.b16 %v168
    %v207 = vunpack.c.l.b16 %v169
    %v208 = vunpack.c.l.b16 %v170
    %v209 = vunpack.c.l.b16 %v171
    %v210 = vunpack.c.l.b16 %v172
    %v211 = vunpack.c.l.b16 %v173
    %v212 = vunpack.c.l.b16 %v174
    %v213 = vunpack.c.l.b16 %v175
    %v214 = vunpack.c.l.b16 %v176
    %v215 = vunpack.c.l.b16 %v177
    %v216 = vunpack.c.l.b16 %v178
    %v217 = vunpack.c.l.b16 %v179
    %v218 = vunpack.c.l.b16 %v180
    %v219 = vunpack.c.l.b16 %v181
    %v220 = vunpack.c.l.b16 %v182
    %v221 = vunpack.c.l.b16 %v183
    %v222 = vpack.c.b16 %v207, %v206
    %v223 = vpack.c.b16 %v209, %v208
    %v224 = vpack.c.b16 %v211, %v210
    %v225 = vpack.c.b16 %v213, %v212
    %v226 = vpack.c.b16 %v215, %v214
    %v227 = vpack.c.b16 %v217, %v216
    %v228 = vpack.c.b16 %v219, %v218
    %v229 = vpack.c.b16 %v221, %v220
    %238 = vmatprep.subr.bf16.mxu0 0
    %239 = vmatpush1.bf16.msra.mxu0 %v222
    %240 = vmatprep.subr.bf16.mxu0 0
    %241 = vmatpush1.bf16.msra.mxu0 %v223
    %242 = vmatprep.subr.bf16.mxu0 0
    %243 = vmatpush1.bf16.msra.mxu0 %v224
    %244 = vmatprep.subr.bf16.mxu0 0
    %245 = vmatpush1.bf16.msra.mxu0 %v225
    %246 = vmatprep.subr.bf16.mxu0 0
    %247 = vmatpush1.bf16.msra.mxu0 %v226
    %248 = vmatprep.subr.bf16.mxu0 0
    %249 = vmatpush1.bf16.msra.mxu0 %v227
    %250 = vmatprep.subr.bf16.mxu0 0
    %251 = vmatpush1.bf16.msra.mxu0 %v228
    %252 = vmatprep.subr.bf16.mxu0 0
    %253 = vmatpush1.bf16.msra.mxu0 %v229
    %254 = vmatprep.subr.bf16.mxu0 0
    %255 = vmatpush1.bf16.msra.mxu0 0
    %256 = vmatprep.subr.bf16.mxu0 0
    %257 = vmatpush1.bf16.msra.mxu0 0
    %258 = vmatprep.subr.bf16.mxu0 0
    %259 = vmatpush1.bf16.msra.mxu0 0
    %260 = vmatprep.subr.bf16.mxu0 0
    %261 = vmatpush1.bf16.msra.mxu0 0
    %262 = vmatprep.subr.bf16.mxu0 0
    %263 = vmatpush1.bf16.msra.mxu0 0
    %264 = vmatprep.subr.bf16.mxu0 0
    %265 = vmatpush1.bf16.msra.mxu0 0
    %266 = vmatprep.subr.bf16.mxu0 0
    %267 = vmatpush1.bf16.msra.mxu0 0
    %268 = vmatprep.subr.bf16.mxu0 0
    %269 = vmatpush1.bf16.msra.mxu0 0
    %270 = vmatprep.mubr.bf16.mxu0 0
    %271 = vmatmul.mubr.bf16.gmra.mrb[0].mxu0 %v185
    %v272 = vpop.f32.mrb[0].mxu0
    %v273 = vadd.f32 %v189, %v272
    %v274 = vpop.f32.mrb[0].mxu0
    %v275 = vpop.f32.mrb[0].mxu0
    %v276 = vpop.f32.mrb[0].mxu0
    %277 = vdwg.mxu0
    %v278 = vtanh.pop %v273
    %s279 = scalar_lea.vmem [#allocation5], 128
    %v280 = vld [vmem:[%s279] sm:$0xf]
    %v281 = vld [vmem:[%s279 + $0x4] sm:$0xf]
    %v282 = vld [vmem:[%s279 + $0x8] sm:$0xf]
    %v283 = vld [vmem:[%s279 + $0xc] sm:$0xf]
    %v284 = vld [vmem:[%s279 + $0x10] sm:$0xf]
    %v285 = vld [vmem:[%s279 + $0x14] sm:$0xf]
    %v286 = vld [vmem:[%s279 + $0x18] sm:$0xf]
    %v287 = vld [vmem:[%s279 + $0x1c] sm:$0xf]
    %v288 = vld [vmem:[%s279 + $0x20] sm:$0xf]
    %v289 = vld [vmem:[%s279 + $0x24] sm:$0xf]
    %v290 = vld [vmem:[%s279 + $0x28] sm:$0xf]
    %v291 = vld [vmem:[%s279 + $0x2c] sm:$0xf]
    %v292 = vld [vmem:[%s279 + $0x30] sm:$0xf]
    %v293 = vld [vmem:[%s279 + $0x34] sm:$0xf]
    %v294 = vld [vmem:[%s279 + $0x38] sm:$0xf]
    %v295 = vld [vmem:[%s279 + $0x3c] sm:$0xf]
    %v296 = vld [vmem:[#allocation7 + $0x2] sm:$0x1]
    %v297 = vpack.c.bf16 %v278, %v278
    %v298 = vlaneseq
    %v299 = vshrl.u32 %v298, 7
    %v300 = vsub.s32 0, %v299
    %v301 = vrot.slane %v296, %v300
    %v318 = vunpack.c.l.b16 %v280
    %v319 = vunpack.c.l.b16 %v281
    %v320 = vunpack.c.l.b16 %v282
    %v321 = vunpack.c.l.b16 %v283
    %v322 = vunpack.c.l.b16 %v284
    %v323 = vunpack.c.l.b16 %v285
    %v324 = vunpack.c.l.b16 %v286
    %v325 = vunpack.c.l.b16 %v287
    %v326 = vunpack.c.l.b16 %v288
    %v327 = vunpack.c.l.b16 %v289
    %v328 = vunpack.c.l.b16 %v290
    %v329 = vunpack.c.l.b16 %v291
    %v330 = vunpack.c.l.b16 %v292
    %v331 = vunpack.c.l.b16 %v293
    %v332 = vunpack.c.l.b16 %v294
    %v333 = vunpack.c.l.b16 %v295
    %v334 = vpack.c.b16 %v319, %v318
    %v335 = vpack.c.b16 %v321, %v320
    %v336 = vpack.c.b16 %v323, %v322
    %v337 = vpack.c.b16 %v325, %v324
    %v338 = vpack.c.b16 %v327, %v326
    %v339 = vpack.c.b16 %v329, %v328
    %v340 = vpack.c.b16 %v331, %v330
    %v341 = vpack.c.b16 %v333, %v332
    %350 = vmatprep.subr.bf16.mxu0 0
    %351 = vmatpush1.bf16.msra.mxu0 %v334
    %352 = vmatprep.subr.bf16.mxu0 0
    %353 = vmatpush1.bf16.msra.mxu0 %v335
    %354 = vmatprep.subr.bf16.mxu0 0
    %355 = vmatpush1.bf16.msra.mxu0 %v336
    %356 = vmatprep.subr.bf16.mxu0 0
    %357 = vmatpush1.bf16.msra.mxu0 %v337
    %358 = vmatprep.subr.bf16.mxu0 0
    %359 = vmatpush1.bf16.msra.mxu0 %v338
    %360 = vmatprep.subr.bf16.mxu0 0
    %361 = vmatpush1.bf16.msra.mxu0 %v339
    %362 = vmatprep.subr.bf16.mxu0 0
    %363 = vmatpush1.bf16.msra.mxu0 %v340
    %364 = vmatprep.subr.bf16.mxu0 0
    %365 = vmatpush1.bf16.msra.mxu0 %v341
    %366 = vmatprep.subr.bf16.mxu0 0
    %367 = vmatpush1.bf16.msra.mxu0 0
    %368 = vmatprep.subr.bf16.mxu0 0
    %369 = vmatpush1.bf16.msra.mxu0 0
    %370 = vmatprep.subr.bf16.mxu0 0
    %371 = vmatpush1.bf16.msra.mxu0 0
    %372 = vmatprep.subr.bf16.mxu0 0
    %373 = vmatpush1.bf16.msra.mxu0 0
    %374 = vmatprep.subr.bf16.mxu0 0
    %375 = vmatpush1.bf16.msra.mxu0 0
    %376 = vmatprep.subr.bf16.mxu0 0
    %377 = vmatpush1.bf16.msra.mxu0 0
    %378 = vmatprep.subr.bf16.mxu0 0
    %379 = vmatpush1.bf16.msra.mxu0 0
    %380 = vmatprep.subr.bf16.mxu0 0
    %381 = vmatpush1.bf16.msra.mxu0 0
    %382 = vmatprep.mubr.bf16.mxu0 0
    %383 = vmatmul.mubr.bf16.gmra.mrb[0].mxu0 %v297
    %v384 = vpop.f32.mrb[0].mxu0
    %v385 = vadd.f32 %v301, %v384
    %v386 = vpop.f32.mrb[0].mxu0
    %v387 = vpop.f32.mrb[0].mxu0
    %v388 = vpop.f32.mrb[0].mxu0
    %389 = vdwg.mxu0
    %v390 = vtanh.pop %v385
    %s391 = scalar_lea.vmem [#allocation5], 192
    %v392 = vld [vmem:[%s391] sm:$0xf]
    %v393 = vld [vmem:[%s391 + $0x4] sm:$0xf]
    %v394 = vld [vmem:[%s391 + $0x8] sm:$0xf]
    %v395 = vld [vmem:[%s391 + $0xc] sm:$0xf]
    %v396 = vld [vmem:[%s391 + $0x10] sm:$0xf]
    %v397 = vld [vmem:[%s391 + $0x14] sm:$0xf]
    %v398 = vld [vmem:[%s391 + $0x18] sm:$0xf]
    %v399 = vld [vmem:[%s391 + $0x1c] sm:$0xf]
    %v400 = vld [vmem:[%s391 + $0x20] sm:$0xf]
    %v401 = vld [vmem:[%s391 + $0x24] sm:$0xf]
    %v402 = vld [vmem:[%s391 + $0x28] sm:$0xf]
    %v403 = vld [vmem:[%s391 + $0x2c] sm:$0xf]
    %v404 = vld [vmem:[%s391 + $0x30] sm:$0xf]
    %v405 = vld [vmem:[%s391 + $0x34] sm:$0xf]
    %v406 = vld [vmem:[%s391 + $0x38] sm:$0xf]
    %v407 = vld [vmem:[%s391 + $0x3c] sm:$0xf]
    %v408 = vld [vmem:[#allocation7 + $0x3] sm:$0x1]
    %v409 = vpack.c.bf16 %v390, %v390
    %v410 = vlaneseq
    %v411 = vshrl.u32 %v410, 7
    %v412 = vsub.s32 0, %v411
    %v413 = vrot.slane %v408, %v412
    %v430 = vunpack.c.l.b16 %v392
    %v431 = vunpack.c.l.b16 %v393
    %v432 = vunpack.c.l.b16 %v394
    %v433 = vunpack.c.l.b16 %v395
    %v434 = vunpack.c.l.b16 %v396
    %v435 = vunpack.c.l.b16 %v397
    %v436 = vunpack.c.l.b16 %v398
    %v437 = vunpack.c.l.b16 %v399
    %v438 = vunpack.c.l.b16 %v400
    %v439 = vunpack.c.l.b16 %v401
    %v440 = vunpack.c.l.b16 %v402
    %v441 = vunpack.c.l.b16 %v403
    %v442 = vunpack.c.l.b16 %v404
    %v443 = vunpack.c.l.b16 %v405
    %v444 = vunpack.c.l.b16 %v406
    %v445 = vunpack.c.l.b16 %v407
    %v446 = vpack.c.b16 %v431, %v430
    %v447 = vpack.c.b16 %v433, %v432
    %v448 = vpack.c.b16 %v435, %v434
    %v449 = vpack.c.b16 %v437, %v436
    %v450 = vpack.c.b16 %v439, %v438
    %v451 = vpack.c.b16 %v441, %v440
    %v452 = vpack.c.b16 %v443, %v442
    %v453 = vpack.c.b16 %v445, %v444
    %462 = vmatprep.subr.bf16.mxu0 0
    %463 = vmatpush1.bf16.msra.mxu0 %v446
    %464 = vmatprep.subr.bf16.mxu0 0
    %465 = vmatpush1.bf16.msra.mxu0 %v447
    %466 = vmatprep.subr.bf16.mxu0 0
    %467 = vmatpush1.bf16.msra.mxu0 %v448
    %468 = vmatprep.subr.bf16.mxu0 0
    %469 = vmatpush1.bf16.msra.mxu0 %v449
    %470 = vmatprep.subr.bf16.mxu0 0
    %471 = vmatpush1.bf16.msra.mxu0 %v450
    %472 = vmatprep.subr.bf16.mxu0 0
    %473 = vmatpush1.bf16.msra.mxu0 %v451
    %474 = vmatprep.subr.bf16.mxu0 0
    %475 = vmatpush1.bf16.msra.mxu0 %v452
    %476 = vmatprep.subr.bf16.mxu0 0
    %477 = vmatpush1.bf16.msra.mxu0 %v453
    %478 = vmatprep.subr.bf16.mxu0 0
    %479 = vmatpush1.bf16.msra.mxu0 0
    %480 = vmatprep.subr.bf16.mxu0 0
    %481 = vmatpush1.bf16.msra.mxu0 0
    %482 = vmatprep.subr.bf16.mxu0 0
    %483 = vmatpush1.bf16.msra.mxu0 0
    %484 = vmatprep.subr.bf16.mxu0 0
    %485 = vmatpush1.bf16.msra.mxu0 0
    %486 = vmatprep.subr.bf16.mxu0 0
    %487 = vmatpush1.bf16.msra.mxu0 0
    %488 = vmatprep.subr.bf16.mxu0 0
    %489 = vmatpush1.bf16.msra.mxu0 0
    %490 = vmatprep.subr.bf16.mxu0 0
    %491 = vmatpush1.bf16.msra.mxu0 0
    %492 = vmatprep.subr.bf16.mxu0 0
    %493 = vmatpush1.bf16.msra.mxu0 0
    %494 = vmatprep.mubr.bf16.mxu0 0
    %495 = vmatmul.mubr.bf16.gmra.mrb[0].mxu0 %v409
    %v496 = vpop.f32.mrb[0].mxu0
    %v497 = vadd.f32 %v413, %v496
    %v498 = vpop.f32.mrb[0].mxu0
    %v499 = vpop.f32.mrb[0].mxu0
    %v500 = vpop.f32.mrb[0].mxu0
    %501 = vdwg.mxu0
    %v502 = vtanh.pop %v497
    %s503 = scalar_lea.vmem [#allocation5], 256
    %v504 = vld [vmem:[%s503] sm:$0xf]
    %v505 = vld [vmem:[%s503 + $0x4] sm:$0xf]
    %v506 = vld [vmem:[%s503 + $0x8] sm:$0xf]
    %v507 = vld [vmem:[%s503 + $0xc] sm:$0xf]
    %v508 = vld [vmem:[%s503 + $0x10] sm:$0xf]
    %v509 = vld [vmem:[%s503 + $0x14] sm:$0xf]
    %v510 = vld [vmem:[%s503 + $0x18] sm:$0xf]
    %v511 = vld [vmem:[%s503 + $0x1c] sm:$0xf]
    %v512 = vld [vmem:[%s503 + $0x20] sm:$0xf]
    %v513 = vld [vmem:[%s503 + $0x24] sm:$0xf]
    %v514 = vld [vmem:[%s503 + $0x28] sm:$0xf]
    %v515 = vld [vmem:[%s503 + $0x2c] sm:$0xf]
    %v516 = vld [vmem:[%s503 + $0x30] sm:$0xf]
    %v517 = vld [vmem:[%s503 + $0x34] sm:$0xf]
    %v518 = vld [vmem:[%s503 + $0x38] sm:$0xf]
    %v519 = vld [vmem:[%s503 + $0x3c] sm:$0xf]
    %v520 = vld [vmem:[#allocation7 + $0x4] sm:$0x1]
    %v521 = vpack.c.bf16 %v502, %v502
    %v522 = vlaneseq
    %v523 = vshrl.u32 %v522, 7
    %v524 = vsub.s32 0, %v523
    %v525 = vrot.slane %v520, %v524
    %v542 = vunpack.c.l.b16 %v504
    %v543 = vunpack.c.l.b16 %v505
    %v544 = vunpack.c.l.b16 %v506
    %v545 = vunpack.c.l.b16 %v507
    %v546 = vunpack.c.l.b16 %v508
    %v547 = vunpack.c.l.b16 %v509
    %v548 = vunpack.c.l.b16 %v510
    %v549 = vunpack.c.l.b16 %v511
    %v550 = vunpack.c.l.b16 %v512
    %v551 = vunpack.c.l.b16 %v513
    %v552 = vunpack.c.l.b16 %v514
    %v553 = vunpack.c.l.b16 %v515
    %v554 = vunpack.c.l.b16 %v516
    %v555 = vunpack.c.l.b16 %v517
    %v556 = vunpack.c.l.b16 %v518
    %v557 = vunpack.c.l.b16 %v519
    %v558 = vpack.c.b16 %v543, %v542
    %v559 = vpack.c.b16 %v545, %v544
    %v560 = vpack.c.b16 %v547, %v546
    %v561 = vpack.c.b16 %v549, %v548
    %v562 = vpack.c.b16 %v551, %v550
    %v563 = vpack.c.b16 %v553, %v552
    %v564 = vpack.c.b16 %v555, %v554
    %v565 = vpack.c.b16 %v557, %v556
    %574 = vmatprep.subr.bf16.mxu0 0
    %575 = vmatpush1.bf16.msra.mxu0 %v558
    %576 = vmatprep.subr.bf16.mxu0 0
    %577 = vmatpush1.bf16.msra.mxu0 %v559
    %578 = vmatprep.subr.bf16.mxu0 0
    %579 = vmatpush1.bf16.msra.mxu0 %v560
    %580 = vmatprep.subr.bf16.mxu0 0
    %581 = vmatpush1.bf16.msra.mxu0 %v561
    %582 = vmatprep.subr.bf16.mxu0 0
    %583 = vmatpush1.bf16.msra.mxu0 %v562
    %584 = vmatprep.subr.bf16.mxu0 0
    %585 = vmatpush1.bf16.msra.mxu0 %v563
    %586 = vmatprep.subr.bf16.mxu0 0
    %587 = vmatpush1.bf16.msra.mxu0 %v564
    %588 = vmatprep.subr.bf16.mxu0 0
    %589 = vmatpush1.bf16.msra.mxu0 %v565
    %590 = vmatprep.subr.bf16.mxu0 0
    %591 = vmatpush1.bf16.msra.mxu0 0
    %592 = vmatprep.subr.bf16.mxu0 0
    %593 = vmatpush1.bf16.msra.mxu0 0
    %594 = vmatprep.subr.bf16.mxu0 0
    %595 = vmatpush1.bf16.msra.mxu0 0
    %596 = vmatprep.subr.bf16.mxu0 0
    %597 = vmatpush1.bf16.msra.mxu0 0
    %598 = vmatprep.subr.bf16.mxu0 0
    %599 = vmatpush1.bf16.msra.mxu0 0
    %600 = vmatprep.subr.bf16.mxu0 0
    %601 = vmatpush1.bf16.msra.mxu0 0
    %602 = vmatprep.subr.bf16.mxu0 0
    %603 = vmatpush1.bf16.msra.mxu0 0
    %604 = vmatprep.subr.bf16.mxu0 0
    %605 = vmatpush1.bf16.msra.mxu0 0
    %606 = vmatprep.mubr.bf16.mxu0 0
    %607 = vmatmul.mubr.bf16.gmra.mrb[0].mxu0 %v521
    %v608 = vpop.f32.mrb[0].mxu0
    %v609 = vadd.f32 %v525, %v608
    %v610 = vpop.f32.mrb[0].mxu0
    %v611 = vpop.f32.mrb[0].mxu0
    %v612 = vpop.f32.mrb[0].mxu0
    %613 = vdwg.mxu0
    %v614 = vtanh.pop %v609
    %s615 = scalar_lea.vmem [#allocation5], 320
    %v616 = vld [vmem:[%s615] sm:$0xf]
    %v617 = vld [vmem:[%s615 + $0x4] sm:$0xf]
    %v618 = vld [vmem:[%s615 + $0x8] sm:$0xf]
    %v619 = vld [vmem:[%s615 + $0xc] sm:$0xf]
    %v620 = vld [vmem:[%s615 + $0x10] sm:$0xf]
    %v621 = vld [vmem:[%s615 + $0x14] sm:$0xf]
    %v622 = vld [vmem:[%s615 + $0x18] sm:$0xf]
    %v623 = vld [vmem:[%s615 + $0x1c] sm:$0xf]
    %v624 = vld [vmem:[%s615 + $0x20] sm:$0xf]
    %v625 = vld [vmem:[%s615 + $0x24] sm:$0xf]
    %v626 = vld [vmem:[%s615 + $0x28] sm:$0xf]
    %v627 = vld [vmem:[%s615 + $0x2c] sm:$0xf]
    %v628 = vld [vmem:[%s615 + $0x30] sm:$0xf]
    %v629 = vld [vmem:[%s615 + $0x34] sm:$0xf]
    %v630 = vld [vmem:[%s615 + $0x38] sm:$0xf]
    %v631 = vld [vmem:[%s615 + $0x3c] sm:$0xf]
    %v632 = vld [vmem:[#allocation7 + $0x5] sm:$0x1]
    %v633 = vpack.c.bf16 %v614, %v614
    %v634 = vlaneseq
    %v635 = vshrl.u32 %v634, 7
    %v636 = vsub.s32 0, %v635
    %v637 = vrot.slane %v632, %v636
    %v654 = vunpack.c.l.b16 %v616
    %v655 = vunpack.c.l.b16 %v617
    %v656 = vunpack.c.l.b16 %v618
    %v657 = vunpack.c.l.b16 %v619
    %v658 = vunpack.c.l.b16 %v620
    %v659 = vunpack.c.l.b16 %v621
    %v660 = vunpack.c.l.b16 %v622
    %v661 = vunpack.c.l.b16 %v623
    %v662 = vunpack.c.l.b16 %v624
    %v663 = vunpack.c.l.b16 %v625
    %v664 = vunpack.c.l.b16 %v626
    %v665 = vunpack.c.l.b16 %v627
    %v666 = vunpack.c.l.b16 %v628
    %v667 = vunpack.c.l.b16 %v629
    %v668 = vunpack.c.l.b16 %v630
    %v669 = vunpack.c.l.b16 %v631
    %v670 = vpack.c.b16 %v655, %v654
    %v671 = vpack.c.b16 %v657, %v656
    %v672 = vpack.c.b16 %v659, %v658
    %v673 = vpack.c.b16 %v661, %v660
    %v674 = vpack.c.b16 %v663, %v662
    %v675 = vpack.c.b16 %v665, %v664
    %v676 = vpack.c.b16 %v667, %v666
    %v677 = vpack.c.b16 %v669, %v668
    %686 = vmatprep.subr.bf16.mxu0 0
    %687 = vmatpush1.bf16.msra.mxu0 %v670
    %688 = vmatprep.subr.bf16.mxu0 0
    %689 = vmatpush1.bf16.msra.mxu0 %v671
    %690 = vmatprep.subr.bf16.mxu0 0
    %691 = vmatpush1.bf16.msra.mxu0 %v672
    %692 = vmatprep.subr.bf16.mxu0 0
    %693 = vmatpush1.bf16.msra.mxu0 %v673
    %694 = vmatprep.subr.bf16.mxu0 0
    %695 = vmatpush1.bf16.msra.mxu0 %v674
    %696 = vmatprep.subr.bf16.mxu0 0
    %697 = vmatpush1.bf16.msra.mxu0 %v675
    %698 = vmatprep.subr.bf16.mxu0 0
    %699 = vmatpush1.bf16.msra.mxu0 %v676
    %700 = vmatprep.subr.bf16.mxu0 0
    %701 = vmatpush1.bf16.msra.mxu0 %v677
    %702 = vmatprep.subr.bf16.mxu0 0
    %703 = vmatpush1.bf16.msra.mxu0 0
    %704 = vmatprep.subr.bf16.mxu0 0
    %705 = vmatpush1.bf16.msra.mxu0 0
    %706 = vmatprep.subr.bf16.mxu0 0
    %707 = vmatpush1.bf16.msra.mxu0 0
    %708 = vmatprep.subr.bf16.mxu0 0
    %709 = vmatpush1.bf16.msra.mxu0 0
    %710 = vmatprep.subr.bf16.mxu0 0
    %711 = vmatpush1.bf16.msra.mxu0 0
    %712 = vmatprep.subr.bf16.mxu0 0
    %713 = vmatpush1.bf16.msra.mxu0 0
    %714 = vmatprep.subr.bf16.mxu0 0
    %715 = vmatpush1.bf16.msra.mxu0 0
    %716 = vmatprep.subr.bf16.mxu0 0
    %717 = vmatpush1.bf16.msra.mxu0 0
    %718 = vmatprep.mubr.bf16.mxu0 0
    %719 = vmatmul.mubr.bf16.gmra.mrb[0].mxu0 %v633
    %v720 = vpop.f32.mrb[0].mxu0
    %v721 = vadd.f32 %v637, %v720
    %v722 = vpop.f32.mrb[0].mxu0
    %v723 = vpop.f32.mrb[0].mxu0
    %v724 = vpop.f32.mrb[0].mxu0
    %725 = vdwg.mxu0
    %v726 = vtanh.pop %v721
    %s727 = scalar_lea.vmem [#allocation5], 384
    %v728 = vld [vmem:[%s727] sm:$0xf]
    %v729 = vld [vmem:[%s727 + $0x4] sm:$0xf]
    %v730 = vld [vmem:[%s727 + $0x8] sm:$0xf]
    %v731 = vld [vmem:[%s727 + $0xc] sm:$0xf]
    %v732 = vld [vmem:[%s727 + $0x10] sm:$0xf]
    %v733 = vld [vmem:[%s727 + $0x14] sm:$0xf]
    %v734 = vld [vmem:[%s727 + $0x18] sm:$0xf]
    %v735 = vld [vmem:[%s727 + $0x1c] sm:$0xf]
    %v736 = vld [vmem:[%s727 + $0x20] sm:$0xf]
    %v737 = vld [vmem:[%s727 + $0x24] sm:$0xf]
    %v738 = vld [vmem:[%s727 + $0x28] sm:$0xf]
    %v739 = vld [vmem:[%s727 + $0x2c] sm:$0xf]
    %v740 = vld [vmem:[%s727 + $0x30] sm:$0xf]
    %v741 = vld [vmem:[%s727 + $0x34] sm:$0xf]
    %v742 = vld [vmem:[%s727 + $0x38] sm:$0xf]
    %v743 = vld [vmem:[%s727 + $0x3c] sm:$0xf]
    %v744 = vld [vmem:[#allocation7 + $0x6] sm:$0x1]
    %v745 = vpack.c.bf16 %v726, %v726
    %v746 = vlaneseq
    %v747 = vshrl.u32 %v746, 7
    %v748 = vsub.s32 0, %v747
    %v749 = vrot.slane %v744, %v748
    %v766 = vunpack.c.l.b16 %v728
    %v767 = vunpack.c.l.b16 %v729
    %v768 = vunpack.c.l.b16 %v730
    %v769 = vunpack.c.l.b16 %v731
    %v770 = vunpack.c.l.b16 %v732
    %v771 = vunpack.c.l.b16 %v733
    %v772 = vunpack.c.l.b16 %v734
    %v773 = vunpack.c.l.b16 %v735
    %v774 = vunpack.c.l.b16 %v736
    %v775 = vunpack.c.l.b16 %v737
    %v776 = vunpack.c.l.b16 %v738
    %v777 = vunpack.c.l.b16 %v739
    %v778 = vunpack.c.l.b16 %v740
    %v779 = vunpack.c.l.b16 %v741
    %v780 = vunpack.c.l.b16 %v742
    %v781 = vunpack.c.l.b16 %v743
    %v782 = vpack.c.b16 %v767, %v766
    %v783 = vpack.c.b16 %v769, %v768
    %v784 = vpack.c.b16 %v771, %v770
    %v785 = vpack.c.b16 %v773, %v772
    %v786 = vpack.c.b16 %v775, %v774
    %v787 = vpack.c.b16 %v777, %v776
    %v788 = vpack.c.b16 %v779, %v778
    %v789 = vpack.c.b16 %v781, %v780
    %798 = vmatprep.subr.bf16.mxu0 0
    %799 = vmatpush1.bf16.msra.mxu0 %v782
    %800 = vmatprep.subr.bf16.mxu0 0
    %801 = vmatpush1.bf16.msra.mxu0 %v783
    %802 = vmatprep.subr.bf16.mxu0 0
    %803 = vmatpush1.bf16.msra.mxu0 %v784
    %804 = vmatprep.subr.bf16.mxu0 0
    %805 = vmatpush1.bf16.msra.mxu0 %v785
    %806 = vmatprep.subr.bf16.mxu0 0
    %807 = vmatpush1.bf16.msra.mxu0 %v786
    %808 = vmatprep.subr.bf16.mxu0 0
    %809 = vmatpush1.bf16.msra.mxu0 %v787
    %810 = vmatprep.subr.bf16.mxu0 0
    %811 = vmatpush1.bf16.msra.mxu0 %v788
    %812 = vmatprep.subr.bf16.mxu0 0
    %813 = vmatpush1.bf16.msra.mxu0 %v789
    %814 = vmatprep.subr.bf16.mxu0 0
    %815 = vmatpush1.bf16.msra.mxu0 0
    %816 = vmatprep.subr.bf16.mxu0 0
    %817 = vmatpush1.bf16.msra.mxu0 0
    %818 = vmatprep.subr.bf16.mxu0 0
    %819 = vmatpush1.bf16.msra.mxu0 0
    %820 = vmatprep.subr.bf16.mxu0 0
    %821 = vmatpush1.bf16.msra.mxu0 0
    %822 = vmatprep.subr.bf16.mxu0 0
    %823 = vmatpush1.bf16.msra.mxu0 0
    %824 = vmatprep.subr.bf16.mxu0 0
    %825 = vmatpush1.bf16.msra.mxu0 0
    %826 = vmatprep.subr.bf16.mxu0 0
    %827 = vmatpush1.bf16.msra.mxu0 0
    %828 = vmatprep.subr.bf16.mxu0 0
    %829 = vmatpush1.bf16.msra.mxu0 0
    %830 = vmatprep.mubr.bf16.mxu0 0
    %831 = vmatmul.mubr.bf16.gmra.mrb[0].mxu0 %v745
    %v832 = vpop.f32.mrb[0].mxu0
    %v833 = vadd.f32 %v749, %v832
    %v834 = vpop.f32.mrb[0].mxu0
    %v835 = vpop.f32.mrb[0].mxu0
    %v836 = vpop.f32.mrb[0].mxu0
    %837 = vdwg.mxu0
    %v838 = vtanh.pop %v833
    %s839 = scalar_lea.vmem [#allocation5], 448
    %v840 = vld [vmem:[%s839] sm:$0xf]
    %v841 = vld [vmem:[%s839 + $0x4] sm:$0xf]
    %v842 = vld [vmem:[%s839 + $0x8] sm:$0xf]
    %v843 = vld [vmem:[%s839 + $0xc] sm:$0xf]
    %v844 = vld [vmem:[%s839 + $0x10] sm:$0xf]
    %v845 = vld [vmem:[%s839 + $0x14] sm:$0xf]
    %v846 = vld [vmem:[%s839 + $0x18] sm:$0xf]
    %v847 = vld [vmem:[%s839 + $0x1c] sm:$0xf]
    %v848 = vld [vmem:[%s839 + $0x20] sm:$0xf]
    %v849 = vld [vmem:[%s839 + $0x24] sm:$0xf]
    %v850 = vld [vmem:[%s839 + $0x28] sm:$0xf]
    %v851 = vld [vmem:[%s839 + $0x2c] sm:$0xf]
    %v852 = vld [vmem:[%s839 + $0x30] sm:$0xf]
    %v853 = vld [vmem:[%s839 + $0x34] sm:$0xf]
    %v854 = vld [vmem:[%s839 + $0x38] sm:$0xf]
    %v855 = vld [vmem:[%s839 + $0x3c] sm:$0xf]
    %v856 = vld [vmem:[#allocation7 + $0x7] sm:$0x1]
    %v857 = vpack.c.bf16 %v838, %v838
    %v858 = vlaneseq
    %v859 = vshrl.u32 %v858, 7
    %v860 = vsub.s32 0, %v859
    %v861 = vrot.slane %v856, %v860
    %v878 = vunpack.c.l.b16 %v840
    %v879 = vunpack.c.l.b16 %v841
    %v880 = vunpack.c.l.b16 %v842
    %v881 = vunpack.c.l.b16 %v843
    %v882 = vunpack.c.l.b16 %v844
    %v883 = vunpack.c.l.b16 %v845
    %v884 = vunpack.c.l.b16 %v846
    %v885 = vunpack.c.l.b16 %v847
    %v886 = vunpack.c.l.b16 %v848
    %v887 = vunpack.c.l.b16 %v849
    %v888 = vunpack.c.l.b16 %v850
    %v889 = vunpack.c.l.b16 %v851
    %v890 = vunpack.c.l.b16 %v852
    %v891 = vunpack.c.l.b16 %v853
    %v892 = vunpack.c.l.b16 %v854
    %v893 = vunpack.c.l.b16 %v855
    %v894 = vpack.c.b16 %v879, %v878
    %v895 = vpack.c.b16 %v881, %v880
    %v896 = vpack.c.b16 %v883, %v882
    %v897 = vpack.c.b16 %v885, %v884
    %v898 = vpack.c.b16 %v887, %v886
    %v899 = vpack.c.b16 %v889, %v888
    %v900 = vpack.c.b16 %v891, %v890
    %v901 = vpack.c.b16 %v893, %v892
    %910 = vmatprep.subr.bf16.mxu0 0
    %911 = vmatpush1.bf16.msra.mxu0 %v894
    %912 = vmatprep.subr.bf16.mxu0 0
    %913 = vmatpush1.bf16.msra.mxu0 %v895
    %914 = vmatprep.subr.bf16.mxu0 0
    %915 = vmatpush1.bf16.msra.mxu0 %v896
    %916 = vmatprep.subr.bf16.mxu0 0
    %917 = vmatpush1.bf16.msra.mxu0 %v897
    %918 = vmatprep.subr.bf16.mxu0 0
    %919 = vmatpush1.bf16.msra.mxu0 %v898
    %920 = vmatprep.subr.bf16.mxu0 0
    %921 = vmatpush1.bf16.msra.mxu0 %v899
    %922 = vmatprep.subr.bf16.mxu0 0
    %923 = vmatpush1.bf16.msra.mxu0 %v900
    %924 = vmatprep.subr.bf16.mxu0 0
    %925 = vmatpush1.bf16.msra.mxu0 %v901
    %926 = vmatprep.subr.bf16.mxu0 0
    %927 = vmatpush1.bf16.msra.mxu0 0
    %928 = vmatprep.subr.bf16.mxu0 0
    %929 = vmatpush1.bf16.msra.mxu0 0
    %930 = vmatprep.subr.bf16.mxu0 0
    %931 = vmatpush1.bf16.msra.mxu0 0
    %932 = vmatprep.subr.bf16.mxu0 0
    %933 = vmatpush1.bf16.msra.mxu0 0
    %934 = vmatprep.subr.bf16.mxu0 0
    %935 = vmatpush1.bf16.msra.mxu0 0
    %936 = vmatprep.subr.bf16.mxu0 0
    %937 = vmatpush1.bf16.msra.mxu0 0
    %938 = vmatprep.subr.bf16.mxu0 0
    %939 = vmatpush1.bf16.msra.mxu0 0
    %940 = vmatprep.subr.bf16.mxu0 0
    %941 = vmatpush1.bf16.msra.mxu0 0
    %942 = vmatprep.mubr.bf16.mxu0 0
    %943 = vmatmul.mubr.bf16.gmra.mrb[0].mxu0 %v857
    %v944 = vpop.f32.mrb[0].mxu0
    %v945 = vadd.f32 %v861, %v944
    %v946 = vpop.f32.mrb[0].mxu0
    %v947 = vpop.f32.mrb[0].mxu0
    %v948 = vpop.f32.mrb[0].mxu0
    %949 = vdwg.mxu0
    %v950 = vtanh.pop %v945
    %s951 = scalar_lea.vmem [#allocation5], 512
    %v952 = vld [vmem:[%s951] sm:$0xf]
    %v953 = vld [vmem:[%s951 + $0x4] sm:$0xf]
    %v954 = vld [vmem:[%s951 + $0x8] sm:$0xf]
    %v955 = vld [vmem:[%s951 + $0xc] sm:$0xf]
    %v956 = vld [vmem:[%s951 + $0x10] sm:$0xf]
    %v957 = vld [vmem:[%s951 + $0x14] sm:$0xf]
    %v958 = vld [vmem:[%s951 + $0x18] sm:$0xf]
    %v959 = vld [vmem:[%s951 + $0x1c] sm:$0xf]
    %v960 = vld [vmem:[%s951 + $0x20] sm:$0xf]
    %v961 = vld [vmem:[%s951 + $0x24] sm:$0xf]
    %v962 = vld [vmem:[%s951 + $0x28] sm:$0xf]
    %v963 = vld [vmem:[%s951 + $0x2c] sm:$0xf]
    %v964 = vld [vmem:[%s951 + $0x30] sm:$0xf]
    %v965 = vld [vmem:[%s951 + $0x34] sm:$0xf]
    %v966 = vld [vmem:[%s951 + $0x38] sm:$0xf]
    %v967 = vld [vmem:[%s951 + $0x3c] sm:$0xf]
    %v968 = vld [vmem:[#allocation7 + $0x8] sm:$0x1]
    %v969 = vpack.c.bf16 %v950, %v950
    %v970 = vlaneseq
    %v971 = vshrl.u32 %v970, 7
    %v972 = vsub.s32 0, %v971
    %v973 = vrot.slane %v968, %v972
    %v990 = vunpack.c.l.b16 %v952
    %v991 = vunpack.c.l.b16 %v953
    %v992 = vunpack.c.l.b16 %v954
    %v993 = vunpack.c.l.b16 %v955
    %v994 = vunpack.c.l.b16 %v956
    %v995 = vunpack.c.l.b16 %v957
    %v996 = vunpack.c.l.b16 %v958
    %v997 = vunpack.c.l.b16 %v959
    %v998 = vunpack.c.l.b16 %v960
    %v999 = vunpack.c.l.b16 %v961
    %v1000 = vunpack.c.l.b16 %v962
    %v1001 = vunpack.c.l.b16 %v963
    %v1002 = vunpack.c.l.b16 %v964
    %v1003 = vunpack.c.l.b16 %v965
    %v1004 = vunpack.c.l.b16 %v966
    %v1005 = vunpack.c.l.b16 %v967
    %v1006 = vpack.c.b16 %v991, %v990
    %v1007 = vpack.c.b16 %v993, %v992
    %v1008 = vpack.c.b16 %v995, %v994
    %v1009 = vpack.c.b16 %v997, %v996
    %v1010 = vpack.c.b16 %v999, %v998
    %v1011 = vpack.c.b16 %v1001, %v1000
    %v1012 = vpack.c.b16 %v1003, %v1002
    %v1013 = vpack.c.b16 %v1005, %v1004
    %1022 = vmatprep.subr.bf16.mxu0 0
    %1023 = vmatpush1.bf16.msra.mxu0 %v1006
    %1024 = vmatprep.subr.bf16.mxu0 0
    %1025 = vmatpush1.bf16.msra.mxu0 %v1007
    %1026 = vmatprep.subr.bf16.mxu0 0
    %1027 = vmatpush1.bf16.msra.mxu0 %v1008
    %1028 = vmatprep.subr.bf16.mxu0 0
    %1029 = vmatpush1.bf16.msra.mxu0 %v1009
    %1030 = vmatprep.subr.bf16.mxu0 0
    %1031 = vmatpush1.bf16.msra.mxu0 %v1010
    %1032 = vmatprep.subr.bf16.mxu0 0
    %1033 = vmatpush1.bf16.msra.mxu0 %v1011
    %1034 = vmatprep.subr.bf16.mxu0 0
    %1035 = vmatpush1.bf16.msra.mxu0 %v1012
    %1036 = vmatprep.subr.bf16.mxu0 0
    %1037 = vmatpush1.bf16.msra.mxu0 %v1013
    %1038 = vmatprep.subr.bf16.mxu0 0
    %1039 = vmatpush1.bf16.msra.mxu0 0
    %1040 = vmatprep.subr.bf16.mxu0 0
    %1041 = vmatpush1.bf16.msra.mxu0 0
    %1042 = vmatprep.subr.bf16.mxu0 0
    %1043 = vmatpush1.bf16.msra.mxu0 0
    %1044 = vmatprep.subr.bf16.mxu0 0
    %1045 = vmatpush1.bf16.msra.mxu0 0
    %1046 = vmatprep.subr.bf16.mxu0 0
    %1047 = vmatpush1.bf16.msra.mxu0 0
    %1048 = vmatprep.subr.bf16.mxu0 0
    %1049 = vmatpush1.bf16.msra.mxu0 0
    %1050 = vmatprep.subr.bf16.mxu0 0
    %1051 = vmatpush1.bf16.msra.mxu0 0
    %1052 = vmatprep.subr.bf16.mxu0 0
    %1053 = vmatpush1.bf16.msra.mxu0 0
    %1054 = vmatprep.mubr.bf16.mxu0 0
    %1055 = vmatmul.mubr.bf16.gmra.mrb[0].mxu0 %v969
    %v1056 = vpop.f32.mrb[0].mxu0
    %v1057 = vadd.f32 %v973, %v1056
    %v1058 = vpop.f32.mrb[0].mxu0
    %v1059 = vpop.f32.mrb[0].mxu0
    %v1060 = vpop.f32.mrb[0].mxu0
    %1061 = vdwg.mxu0
    %1062 = vst [vmem:[#allocation8] sm:$0xff] %v1057
    // Predicated region
    $region26: #{mlp_module_8_128_forward.1} parent=1 // pred_check
      _
    $region27: #{mlp_module_8_128_forward.1} parent=1 // pred_check_branch
      %1064 = sbr.rel (0) target = $region29
    $region28: #{mlp_module_8_128_forward.1} parent=1 // pred_region
      %s1066 = ssub.s32 128, 128
      %1067 = vsyncadd [#allocation4], %s1066
      %s1069 = sshll.u32 [#allocation8], 4
      %s1070 = int_to_ptr.vmem [resolvable:$true] %s1069
      %1072 = dma.vmem_to_hbm [thread:$0]  %s1070, 128, %s3, [#allocation4]
    $region29: #{mlp_module_8_128_forward.1} parent=1 // pred_fallthru
      _
    // Predicated region
    $region30: #{mlp_module_8_128_forward.1} parent=1 // pred_check
      _
    $region31: #{mlp_module_8_128_forward.1} parent=1 // pred_check_branch
      %1074 = sbr.rel (0) target = $region33
    $region32: #{mlp_module_8_128_forward.1} parent=1 // pred_region
      %1075 = dma.done [#allocation4], 128
    $region33: #{mlp_module_8_128_forward.1} parent=1 // pred_fallthru
      _
    %1076 = vsyncpa [#allocation3], 1
    %1077 = vsyncpa [#allocation6], 1
    %1078 = vsyncpa [#allocation4], 1

</llo_original>
